<compile_context>
chip_gen: v7x
topology: tpu7x:2x2x1
jax: 0.10.0
libtpu: 0.0.40
codegen_flags: <defaults>
</compile_context>

<pallas_src>
import functools
import math

import jax
import jax.numpy as jnp
from jax.experimental import pallas as pl
from jax.experimental.pallas import tpu as pltpu

HIDDEN = 100
BN_EPS = 1e-5
LANES = 128
SUBLANES = 8

# bf16 MXU operands with f32 accumulation everywhere; use jnp.float32 when bit-close parity
# with an f32 reference is required.
WEIGHT_DTYPE = jnp.bfloat16

MAX_BATCH_TILE = 2048                        # rows per grid step on the tiled path
SINGLE_PATH_VMEM_BUDGET = 16 * 1024 * 1024   # whole-batch-resident path budget
H_CACHE_VMEM_BUDGET = 24 * 1024 * 1024       # persistent fc1-output cache budget
# TODO(synk): budgets are sized for v7x's 64 MiB VMEM; on v5e/v6e (128 MiB) they could be
# roughly doubled to keep the whole intermediate resident for much larger batches.


def _round_up(x, m):
    return (x + m - 1) // m * m


def _fnn_single_kernel(count_ref, x_ref, w1_ref, p_ref, w2_ref, o_ref, *, h_pad, c_pad):
    """Whole batch resident: fc1 -> BN (centered batch stats) -> ReLU -> fc2 in one program."""
    x = x_ref[...].astype(w1_ref.dtype)
    h = jnp.dot(x, w1_ref[...], preferred_element_type=jnp.float32) + p_ref[0:1, :h_pad]

    valid = jax.lax.broadcasted_iota(jnp.int32, h.shape, 0) < count_ref[0]
    inv_n = 1.0 / count_ref[0].astype(jnp.float32)
    mean = jnp.sum(jnp.where(valid, h, 0.0), axis=0, keepdims=True) * inv_n
    centered = jnp.where(valid, h - mean, 0.0)
    var = jnp.sum(centered * centered, axis=0, keepdims=True) * inv_n   # biased (PyTorch train)

    scale = p_ref[1:2, :h_pad] * jax.lax.rsqrt(var + BN_EPS)
    shift = p_ref[2:3, :h_pad] - mean * scale
    a = jnp.maximum(h * scale + shift, 0.0)
    out = jnp.dot(a.astype(w2_ref.dtype), w2_ref[...],
                  preferred_element_type=jnp.float32) + p_ref[3:4, :c_pad]
    o_ref[...] = out.astype(o_ref.dtype)


def _fnn_tiled_kernel(count_ref, x_ref, w1_ref, p_ref, w2_ref, o_ref,
                      sum_ref, sq_ref, *h_cache, tb, h_pad, c_pad):
    """grid = (pass, batch_tile).  pass 0: fc1 + masked BN stats (+ optional h cache).
    pass 1: normalize + ReLU + fc2.  Output blocks are only produced on pass 1."""
    pass_id = pl.program_id(0)
    tile_id = pl.program_id(1)
    hc_ref = h_cache[0] if h_cache else None

    def fc1():
        x = x_ref[...].astype(w1_ref.dtype)
        return jnp.dot(x, w1_ref[...], preferred_element_type=jnp.float32) + p_ref[0:1, :h_pad]

    @pl.when(jnp.logical_and(pass_id == 0, tile_id == 0))
    def _():
        sum_ref[...] = jnp.zeros_like(sum_ref)
        sq_ref[...] = jnp.zeros_like(sq_ref)

    @pl.when(pass_id == 0)
    def _():
        h = fc1()
        row = jax.lax.broadcasted_iota(jnp.int32, h.shape, 0) + tile_id * tb
        hm = jnp.where(row < count_ref[0], h, 0.0)   # exclude batch-padding rows from stats
        sum_ref[...] += jnp.sum(hm, axis=0, keepdims=True)
        sq_ref[...] += jnp.sum(hm * hm, axis=0, keepdims=True)
        if hc_ref is not None:
            start = pl.multiple_of(tile_id * tb, SUBLANES)
            hc_ref[pl.ds(start, tb), :] = h.astype(hc_ref.dtype)
        # o_ref is intentionally NOT written here: its block index is held constant during
        # pass 0 (see out_specs index_map), so nothing is flushed to HBM until pass 1.

    @pl.when(pass_id == 1)
    def _():
        inv_n = 1.0 / count_ref[0].astype(jnp.float32)
        mean = sum_ref[...] * inv_n
        # TODO(synk): E[h^2]-mean^2 can cancel for large-magnitude activations; a Welford-style
        # per-tile merge would be more robust at the cost of extra scratch / a third pass.
        var = jnp.maximum(sq_ref[...] * inv_n - mean * mean, 0.0)
        scale = p_ref[1:2, :h_pad] * jax.lax.rsqrt(var + BN_EPS)
        shift = p_ref[2:3, :h_pad] - mean * scale
        if hc_ref is not None:
            start = pl.multiple_of(tile_id * tb, SUBLANES)
            h = hc_ref[pl.ds(start, tb), :].astype(jnp.float32)
        else:
            h = fc1()   # huge-batch fallback: recompute fc1 (x streamed twice)
        a = jnp.maximum(h * scale + shift, 0.0)
        out = jnp.dot(a.astype(w2_ref.dtype), w2_ref[...],
                      preferred_element_type=jnp.float32) + p_ref[3:4, :c_pad]
        o_ref[...] = out.astype(o_ref.dtype)


def init_params(key, input_size, num_classes):
    """PyTorch-style init: Linear U(+/-1/sqrt(fan_in)); BN gamma=1, beta=0.
    Linear weights are stored transposed vs. PyTorch, i.e. (in, out), so the kernel
    computes x @ W directly on the MXU."""
    k1, k2, k3, k4 = jax.random.split(key, 4)
    bound1 = 1.0 / math.sqrt(input_size)
    w1 = jax.random.uniform(k1, (input_size, HIDDEN), jnp.float32, -bound1, bound1)
    b1 = jax.random.uniform(k2, (HIDDEN,), jnp.float32, -bound1, bound1)
    gamma = jnp.ones((HIDDEN,), jnp.float32)
    beta = jnp.zeros((HIDDEN,), jnp.float32)
    bound2 = 1.0 / math.sqrt(HIDDEN)
    w2 = jax.random.uniform(k3, (HIDDEN, num_classes), jnp.float32, -bound2, bound2)
    b2 = jax.random.uniform(k4, (num_classes,), jnp.float32, -bound2, bound2)
    return (w1, b1, gamma, beta, w2, b2)


def pack_params(params, weight_dtype=WEIGHT_DTYPE):
    """Zero-pad the feature dims to 128-lane multiples and pack the four per-feature vectors
    (b1, gamma, beta, b2) into one (4, P) f32 operand (1 DMA instead of 4)."""
    w1, b1, gamma, beta, w2, b2 = params
    d, h = w1.shape
    c = w2.shape[1]
    h_pad = _round_up(h, LANES)
    c_pad = _round_up(c, LANES)
    p = max(h_pad, c_pad)
    w1p = jnp.zeros((d, h_pad), weight_dtype).at[:, :h].set(w1.astype(weight_dtype))
    w2p = jnp.zeros((h_pad, c_pad), weight_dtype).at[:h, :c].set(w2.astype(weight_dtype))
    pvec = jnp.zeros((4, p), jnp.float32)
    pvec = pvec.at[0, :h].set(b1)      # fc1 bias
    pvec = pvec.at[1, :h].set(gamma)   # BN weight
    pvec = pvec.at[2, :h].set(beta)    # BN bias
    pvec = pvec.at[3, :c].set(b2)      # fc2 bias
    return (w1p, pvec, w2p, h_pad, c_pad)


def fnn_forward(x, packed, num_classes, *, batch_tile=None, force_tiled=False,
                cache_h=None, unpad=True):
    w1p, pvec, w2p, h_pad, c_pad = packed
    b, d = x.shape
    p = pvec.shape[1]
    x = x.astype(w1p.dtype)        # bf16 x when operands are bf16 -> half the x HBM bytes
    xbytes = x.dtype.itemsize
    wbytes = w1p.dtype.itemsize
    count = jnp.array([b], dtype=jnp.int32)

    weight_bytes = (d * h_pad + h_pad * c_pad) * wbytes + 4 * p * 4
    per_row_bytes = 2 * d * xbytes + 2 * h_pad * 4 + 2 * c_pad * 4
    use_single = (not force_tiled and
                  _round_up(b, SUBLANES) * per_row_bytes + 2 * weight_bytes
                  <= SINGLE_PATH_VMEM_BUDGET)

    if use_single:
        # ---- single-invocation path: whole batch resident, one program, one pass ----
        b_pad = _round_up(b, SUBLANES)
        if b_pad != b:
            x = jnp.pad(x, ((0, b_pad - b), (0, 0)))
        kernel = functools.partial(_fnn_single_kernel, h_pad=h_pad, c_pad=c_pad)
        grid_spec = pltpu.PrefetchScalarGridSpec(
            num_scalar_prefetch=1,                 # valid-row count -> SMEM
            grid=(1,),
            in_specs=[
                pl.BlockSpec((b_pad, d), lambda i, cnt: (0, 0)),         # x
                pl.BlockSpec((d, h_pad), lambda i, cnt: (0, 0)),         # w1
                pl.BlockSpec((4, p), lambda i, cnt: (0, 0)),             # b1/gamma/beta/b2
                pl.BlockSpec((h_pad, c_pad), lambda i, cnt: (0, 0)),     # w2
            ],
            out_specs=pl.BlockSpec((b_pad, c_pad), lambda i, cnt: (0, 0)),
        )
        cost = pl.CostEstimate(
            flops=2 * b_pad * (d * h_pad + h_pad * c_pad),
            transcendentals=h_pad,
            bytes_accessed=b_pad * d * xbytes + weight_bytes + b_pad * c_pad * 4)
        out = pl.pallas_call(
            kernel,
            out_shape=jax.ShapeDtypeStruct((b_pad, c_pad), jnp.float32),
            grid_spec=grid_spec,
            compiler_params=pltpu.CompilerParams(
                dimension_semantics=("arbitrary",),
                vmem_limit_bytes=32 * 1024 * 1024),
            cost_estimate=cost,
        )(count, x, w1p, pvec, w2p)
    else:
        # ---- tiled two-pass path for large batches ----
        if batch_tile is None:
            n_t = -(-b // MAX_BATCH_TILE)                   # minimal #tiles at <= ~2048 rows
            batch_tile = _round_up(-(-b // n_t), SUBLANES)  # even split -> minimal padding
        batch_tile = max(SUBLANES, _round_up(batch_tile, SUBLANES))
        b_pad = _round_up(b, batch_tile)
        if b_pad != b:
            x = jnp.pad(x, ((0, b_pad - b), (0, 0)))
        n_tiles = b_pad // batch_tile

        cache_dtype = jnp.bfloat16 if w1p.dtype == jnp.bfloat16 else jnp.float32
        if cache_h is None:
            cache_h = b_pad * h_pad * jnp.dtype(cache_dtype).itemsize <= H_CACHE_VMEM_BUDGET

        if cache_h:
            last = n_tiles - 1
            # Stream x on pass 0; hold the block index constant on pass 1 (h comes from the
            # VMEM cache), so x is never re-DMA'd from HBM.
            x_map = lambda ph, t, cnt: (t * (1 - ph) + last * ph, 0)
        else:
            x_map = lambda ph, t, cnt: (t, 0)
        # Output block index is constant during pass 0 -> no zero/garbage writeback to HBM.
        out_map = lambda ph, t, cnt: (t * ph, 0)

        scratch = [pltpu.VMEM((1, h_pad), jnp.float32),     # per-feature sum
                   pltpu.VMEM((1, h_pad), jnp.float32)]     # per-feature sum of squares
        if cache_h:
            scratch.append(pltpu.VMEM((b_pad, h_pad), cache_dtype))  # persistent fc1 output

        kernel = functools.partial(_fnn_tiled_kernel, tb=batch_tile,
                                   h_pad=h_pad, c_pad=c_pad)
        grid_spec = pltpu.PrefetchScalarGridSpec(
            num_scalar_prefetch=1,                 # valid-row count -> SMEM
            grid=(2, n_tiles),                     # (pass, batch tile)
            in_specs=[
                pl.BlockSpec((batch_tile, d), x_map),                      # x
                pl.BlockSpec((d, h_pad), lambda ph, t, cnt: (0, 0)),       # w1 (resident)
                pl.BlockSpec((4, p), lambda ph, t, cnt: (0, 0)),           # b1/gamma/beta/b2
                pl.BlockSpec((h_pad, c_pad), lambda ph, t, cnt: (0, 0)),   # w2 (resident)
            ],
            out_specs=pl.BlockSpec((batch_tile, c_pad), out_map),
            scratch_shapes=scratch,
        )
        fc1_passes = 1 if cache_h else 2
        cost = pl.CostEstimate(
            flops=2 * b_pad * (fc1_passes * d * h_pad + h_pad * c_pad),
            transcendentals=h_pad,
            bytes_accessed=(fc1_passes * b_pad * d * xbytes + weight_bytes
                            + b_pad * c_pad * 4))
        out = pl.pallas_call(
            kernel,
            out_shape=jax.ShapeDtypeStruct((b_pad, c_pad), jnp.float32),
            grid_spec=grid_spec,
            compiler_params=pltpu.CompilerParams(
                # Both axes carry a dependency through the BN-stats / h-cache scratch.
                # TODO(synk): on v7x a two-kernel split (parallel stats kernel + tiny XLA
                # reduce + parallel normalize/fc2 kernel) would use both TensorCores.
                dimension_semantics=("arbitrary", "arbitrary"),
                vmem_limit_bytes=(48 if cache_h else 32) * 1024 * 1024),
            cost_estimate=cost,
        )(count, x, w1p, pvec, w2p)

    if not unpad:
        # Callers that can consume the (b_pad, c_pad) lane-dense slab avoid an extra XLA
        # slice/copy of the result.
        return out
    return out[:b, :num_classes]


def fnn_reference(x, params):
    w1, b1, gamma, beta, w2, b2 = params
    h = x @ w1 + b1
    mean = jnp.mean(h, axis=0, keepdims=True)
    var = jnp.mean((h - mean) ** 2, axis=0, keepdims=True)
    h = (h - mean) * jax.lax.rsqrt(var + BN_EPS) * gamma + beta
    h = jnp.maximum(h, 0.0)
    return h @ w2 + b2


if __name__ == "__main__":
    key = jax.random.PRNGKey(0)
    kx, kp, kx2 = jax.random.split(key, 3)

    batch, input_size, num_classes = 8, 32, 10
    x = jax.random.normal(kx, (batch, input_size), jnp.float32)
    params = init_params(kp, input_size, num_classes)
    ref = fnn_reference(x, params)

    # 1) f32 operands, single-invocation path (bit-close verification).
    packed_f32 = pack_params(params, weight_dtype=jnp.float32)
    out_f32 = fnn_forward(x, packed_f32, num_classes)
    jax.block_until_ready(out_f32)
    assert out_f32.shape == (batch, num_classes)
    assert jnp.allclose(out_f32, ref, atol=2e-4, rtol=2e-4), "f32 single-path mismatch"

    # 2) bf16 operands (default perf config), single-invocation path.
    packed_bf16 = pack_params(params, weight_dtype=jnp.bfloat16)
    out_bf16 = fnn_forward(x, packed_bf16, num_classes)
    jax.block_until_ready(out_bf16)
    assert out_bf16.shape == (batch, num_classes)
    assert jnp.allclose(out_bf16, ref, atol=8e-2, rtol=8e-2), "bf16 single-path mismatch"

    # 3) f32, forced two-pass tiled path with the persistent h cache (b not a multiple of 8).
    batch2 = 300
    x2 = jax.random.normal(kx2, (batch2, input_size), jnp.float32)
    ref2 = fnn_reference(x2, params)
    out_t = fnn_forward(x2, packed_f32, num_classes, batch_tile=128, force_tiled=True)
    jax.block_until_ready(out_t)
    assert out_t.shape == (batch2, num_classes)
    assert jnp.allclose(out_t, ref2, atol=1e-3, rtol=1e-3), "tiled (cached-h) mismatch"

    # 4) f32, forced tiled path with fc1 recompute (huge-batch fallback, no h cache).
    out_r = fnn_forward(x2, packed_f32, num_classes, batch_tile=128, force_tiled=True,
                        cache_h=False)
    jax.block_until_ready(out_r)
    assert jnp.allclose(out_r, ref2, atol=1e-3, rtol=1e-3), "tiled (recompute) mismatch"

    print("KERNEL_OK")
</pallas_src>

<mosaic_0001>
module attributes {stable_mosaic.version = 11 : i64} {
  func.func @_fnn_single_kernel(%arg0: i32, %arg1: memref<1xi32, #tpu.memory_space<smem>>, %arg2: memref<8x32xf32, #tpu.memory_space<vmem>>, %arg3: memref<32x128xf32, #tpu.memory_space<vmem>>, %arg4: memref<4x128xf32, #tpu.memory_space<vmem>>, %arg5: memref<128x128xf32, #tpu.memory_space<vmem>>, %arg6: memref<8x128xf32, #tpu.memory_space<vmem>>) attributes {dimension_semantics = [#tpu.dimension_semantics<arbitrary>], iteration_bounds = array<i64: 1>, scalar_prefetch = 1 : i64, scratch_operands = 0 : i64, tpu.core_type = #tpu.core_type<tc>, window_params = [{pipeline_mode = #tpu.pipeline_mode<synchronous>, transform_indices = @transform_0, window_bounds = array<i64: 8, 32>}, {pipeline_mode = #tpu.pipeline_mode<synchronous>, transform_indices = @transform_1, window_bounds = array<i64: 32, 128>}, {pipeline_mode = #tpu.pipeline_mode<synchronous>, transform_indices = @transform_2, window_bounds = array<i64: 4, 128>}, {pipeline_mode = #tpu.pipeline_mode<synchronous>, transform_indices = @transform_3, window_bounds = array<i64: 128, 128>}, {pipeline_mode = #tpu.pipeline_mode<synchronous>, transform_indices = @transform_4, window_bounds = array<i64: 8, 128>}]} {
    %c0 = arith.constant 0 : index
    %c0_0 = arith.constant 0 : index
    %0 = vector.load %arg2[%c0, %c0_0] : memref<8x32xf32, #tpu.memory_space<vmem>>, vector<8x32xf32>
    %c0_1 = arith.constant 0 : index
    %c0_2 = arith.constant 0 : index
    %1 = vector.load %arg3[%c0_1, %c0_2] : memref<32x128xf32, #tpu.memory_space<vmem>>, vector<32x128xf32>
    %cst = arith.constant dense<0.000000e+00> : vector<8x128xf32>
    %2 = tpu.matmul %0, %1, %cst {dimension_numbers = #tpu.dot_dimension_numbers<[1], [0], [0], [1], [0, 0, 1, 1], [], []>} : vector<8x32xf32>, vector<32x128xf32>, vector<8x128xf32> -> vector<8x128xf32>
    %c0_3 = arith.constant 0 : index
    %c0_4 = arith.constant 0 : index
    %3 = vector.load %arg4[%c0_3, %c0_4] : memref<4x128xf32, #tpu.memory_space<vmem>>, vector<1x128xf32>
    %4 = vector.broadcast %3 : vector<1x128xf32> to vector<8x128xf32>
    %5 = arith.addf %2, %4 : vector<8x128xf32>
    %6 = tpu.iota {dimensions = array<i32: 0>} : vector<8x128xi32>
    %c0_5 = arith.constant 0 : index
    %7 = memref.load %arg1[%c0_5] : memref<1xi32, #tpu.memory_space<smem>>
    %8 = vector.broadcast %7 : i32 to vector<8x128xi32>
    %9 = arith.cmpi slt, %6, %8 : vector<8x128xi32>
    %c0_6 = arith.constant 0 : index
    %10 = memref.load %arg1[%c0_6] : memref<1xi32, #tpu.memory_space<smem>>
    %11 = arith.sitofp %10 : i32 to f32
    %cst_7 = arith.constant 1.000000e+00 : f32
    %12 = arith.divf %cst_7, %11 : f32
    %cst_8 = arith.constant 0.000000e+00 : f32
    %13 = vector.broadcast %cst_8 : f32 to vector<8x128xf32>
    %14 = arith.select %9, %5, %13 : vector<8x128xi1>, vector<8x128xf32>
    %cst_9 = arith.constant dense<0.000000e+00> : vector<128xf32>
    %15 = vector.multi_reduction <add>, %14, %cst_9 [0] : vector<8x128xf32> to vector<128xf32>
    %16 = vector.shape_cast %15 : vector<128xf32> to vector<1x128xf32>
    %17 = vector.broadcast %12 : f32 to vector<1x128xf32>
    %18 = arith.mulf %16, %17 : vector<1x128xf32>
    %19 = vector.broadcast %18 : vector<1x128xf32> to vector<8x128xf32>
    %20 = arith.subf %5, %19 : vector<8x128xf32>
    %cst_10 = arith.constant 0.000000e+00 : f32
    %21 = vector.broadcast %cst_10 : f32 to vector<8x128xf32>
    %22 = arith.select %9, %20, %21 : vector<8x128xi1>, vector<8x128xf32>
    %23 = arith.mulf %22, %22 : vector<8x128xf32>
    %cst_11 = arith.constant dense<0.000000e+00> : vector<128xf32>
    %24 = vector.multi_reduction <add>, %23, %cst_11 [0] : vector<8x128xf32> to vector<128xf32>
    %25 = vector.shape_cast %24 : vector<128xf32> to vector<1x128xf32>
    %26 = vector.broadcast %12 : f32 to vector<1x128xf32>
    %27 = arith.mulf %25, %26 : vector<1x128xf32>
    %c1 = arith.constant 1 : index
    %c0_12 = arith.constant 0 : index
    %28 = vector.load %arg4[%c1, %c0_12] : memref<4x128xf32, #tpu.memory_space<vmem>>, vector<1x128xf32>
    %cst_13 = arith.constant 9.99999974E-6 : f32
    %29 = vector.broadcast %cst_13 : f32 to vector<1x128xf32>
    %30 = arith.addf %27, %29 : vector<1x128xf32>
    %31 = math.rsqrt %30 : vector<1x128xf32>
    %32 = arith.mulf %28, %31 : vector<1x128xf32>
    %c2 = arith.constant 2 : index
    %c0_14 = arith.constant 0 : index
    %33 = vector.load %arg4[%c2, %c0_14] : memref<4x128xf32, #tpu.memory_space<vmem>>, vector<1x128xf32>
    %34 = arith.mulf %18, %32 : vector<1x128xf32>
    %35 = arith.subf %33, %34 : vector<1x128xf32>
    %36 = vector.broadcast %32 : vector<1x128xf32> to vector<8x128xf32>
    %37 = arith.mulf %5, %36 : vector<8x128xf32>
    %38 = vector.broadcast %35 : vector<1x128xf32> to vector<8x128xf32>
    %39 = arith.addf %37, %38 : vector<8x128xf32>
    %cst_15 = arith.constant 0.000000e+00 : f32
    %40 = vector.broadcast %cst_15 : f32 to vector<8x128xf32>
    %41 = arith.maximumf %39, %40 : vector<8x128xf32>
    %c0_16 = arith.constant 0 : index
    %c0_17 = arith.constant 0 : index
    %42 = vector.load %arg5[%c0_16, %c0_17] : memref<128x128xf32, #tpu.memory_space<vmem>>, vector<128x128xf32>
    %cst_18 = arith.constant dense<0.000000e+00> : vector<8x128xf32>
    %43 = tpu.matmul %41, %42, %cst_18 {dimension_numbers = #tpu.dot_dimension_numbers<[1], [0], [0], [1], [0, 0, 1, 1], [], []>} : vector<8x128xf32>, vector<128x128xf32>, vector<8x128xf32> -> vector<8x128xf32>
    %c3 = arith.constant 3 : index
    %c0_19 = arith.constant 0 : index
    %44 = vector.load %arg4[%c3, %c0_19] : memref<4x128xf32, #tpu.memory_space<vmem>>, vector<1x128xf32>
    %45 = vector.broadcast %44 : vector<1x128xf32> to vector<8x128xf32>
    %46 = arith.addf %43, %45 : vector<8x128xf32>
    %c0_20 = arith.constant 0 : index
    %c0_21 = arith.constant 0 : index
    %47 = vector.load %arg6[%c0_20, %c0_21] : memref<8x128xf32, #tpu.memory_space<vmem>>, vector<8x128xf32>
    tpu.vector_store %arg6[%c0_20, %c0_21], %46 {strides = array<i32>} : memref<8x128xf32, #tpu.memory_space<vmem>>, vector<8x128xf32>,
    return
  }
  func.func @transform_0(%arg0: i32, %arg1: memref<1xi32, #tpu.memory_space<smem>>) -> (i32, i32) {
    %c0_i32 = arith.constant 0 : i32
    %c0_i32_0 = arith.constant 0 : i32
    %c0_i32_1 = arith.constant 0 : i32
    return %c0_i32, %c0_i32_0 : i32, i32
  }
  func.func @transform_1(%arg0: i32, %arg1: memref<1xi32, #tpu.memory_space<smem>>) -> (i32, i32) {
    %c0_i32 = arith.constant 0 : i32
    %c0_i32_0 = arith.constant 0 : i32
    %c0_i32_1 = arith.constant 0 : i32
    return %c0_i32, %c0_i32_0 : i32, i32
  }
  func.func @transform_2(%arg0: i32, %arg1: memref<1xi32, #tpu.memory_space<smem>>) -> (i32, i32) {
    %c0_i32 = arith.constant 0 : i32
    %c0_i32_0 = arith.constant 0 : i32
    %c0_i32_1 = arith.constant 0 : i32
    return %c0_i32, %c0_i32_0 : i32, i32
  }
  func.func @transform_3(%arg0: i32, %arg1: memref<1xi32, #tpu.memory_space<smem>>) -> (i32, i32) {
    %c0_i32 = arith.constant 0 : i32
    %c0_i32_0 = arith.constant 0 : i32
    %c0_i32_1 = arith.constant 0 : i32
    return %c0_i32, %c0_i32_0 : i32, i32
  }
  func.func @transform_4(%arg0: i32, %arg1: memref<1xi32, #tpu.memory_space<smem>>) -> (i32, i32) {
    %c0_i32 = arith.constant 0 : i32
    %c0_i32_0 = arith.constant 0 : i32
    %c0_i32_1 = arith.constant 0 : i32
    return %c0_i32, %c0_i32_0 : i32, i32
  }
}

</mosaic_0001>

<llo_original>
// kernel: tpu_custom_call.1
$region0: #{tpu_custom_call.1}
  #allocation0 [shape = 'u32[]', space=smem, size = 0x4, offset = 0x4, fixed_abs, tag = 'smem constant byte address 0x4 - core index']
  #allocation1 [shape = 'u32[144,128]{1,0:T(1,128)}', space=vmem, size = 0x12000, scoped, tag = 'internal scratch']
  #allocation2 [shape = 's32[1]{0}', space=sflag, size = 0x4, scoped, tag = 'scoped memory for tpu_custom_call.1']
  #allocation3 [shape = 's32[1]{0:T(128)S(6)}', space=smem, size = 0x200, scoped, tag = 'prefetched SMEM operand 0']
  %s0 = inlined_call_operand.<no memory space> [shape: s32[1], index: 0, kind: input, shape index: {}]
  %s1 = inlined_call_operand.hbm [shape: f32[8,32], index: 1, kind: input, shape index: {}]
  %s2 = inlined_call_operand.hbm [shape: f32[32,128], index: 2, kind: input, shape index: {}]
  %s3 = inlined_call_operand.vmem [shape: f32[4,128], index: 3, kind: input, shape index: {}]
  %s4 = inlined_call_operand.hbm [shape: f32[128,128], index: 4, kind: input, shape index: {}]
  %s5 = inlined_call_operand.hbm [shape: f32[8,128], index: 5, kind: output, shape index: {}]
  %s6 = sld [smem:[#allocation0]]
  $region38: #{tpu_custom_call.1} parent=0
    _
  %s8 = ssub.s32 1, %s6
  %s9 = scalar_select 0, %s8, %s6
  %10 = sst [smem:[#allocation3]] %s0
  $region1: #{tpu_custom_call.1} parent=0
    #allocation4 [shape = 'u8[4096]{0}', space=vmem, size = 0x1000, scoped, tag = 'input window, operand 1, single buffered']
    #allocation5 [shape = 's32[1]{0}', space=sflag, size = 0x4, scoped, tag = 'scoped memory for tpu_custom_call.1']
    #allocation6 [shape = 's32[1]{0}', space=sflag, size = 0x4, scoped, tag = 'scoped memory for tpu_custom_call.1']
    #allocation7 [shape = 'u8[16384]{0}', space=vmem, size = 0x4000, scoped, tag = 'input window, operand 2, single buffered']
    #allocation8 [shape = 's32[1]{0}', space=sflag, size = 0x4, scoped, tag = 'scoped memory for tpu_custom_call.1']
    #allocation9 [shape = 'u8[65536]{0}', space=vmem, size = 0x10000, scoped, tag = 'input window, operand 4, single buffered']
    #allocation10 [shape = 'u8[4096]{0}', space=vmem, size = 0x1000, scoped, tag = 'output window, operand 0, single buffered']
    %11 = vsyncpa [#allocation5], 0
    %12 = vsyncpa [#allocation8], 0
    %13 = vsyncpa [#allocation6], 0
    // Predicated region
    $region2: #{tpu_custom_call.1} parent=1 // pred_check
      _
    $region3: #{tpu_custom_call.1} parent=1 // pred_check_branch
      %15 = sbr.rel (0) target = $region5
    $region4: #{tpu_custom_call.1} parent=1 // pred_region
      %s17 = ssub.s32 128, 128
      %18 = vsyncadd [#allocation5], %s17
      %s20 = sshll.u32 [#allocation4], 4
      %s21 = int_to_ptr.vmem [resolvable:$true] %s20
      %23 = dma.hbm_to_vmem [thread:$0]  %s1, 128, %s21, [#allocation5]
    $region5: #{tpu_custom_call.1} parent=1 // pred_fallthru
      _
    // Predicated region
    $region6: #{tpu_custom_call.1} parent=1 // pred_check
      _
    $region7: #{tpu_custom_call.1} parent=1 // pred_check_branch
      %25 = sbr.rel (0) target = $region9
    $region8: #{tpu_custom_call.1} parent=1 // pred_region
      %s27 = ssub.s32 512, 512
      %28 = vsyncadd [#allocation8], %s27
      %s29 = sshll.u32 [#allocation7], 4
      %s30 = int_to_ptr.vmem [resolvable:$true] %s29
      %35 = dma.hbm_to_vmem [thread:$0]  %s2, 512, %s30, [#allocation8], 128, 128, 8
    $region9: #{tpu_custom_call.1} parent=1 // pred_fallthru
      _
    // Predicated region
    $region10: #{tpu_custom_call.1} parent=1 // pred_check
      _
    $region11: #{tpu_custom_call.1} parent=1 // pred_check_branch
      %37 = sbr.rel (0) target = $region13
    $region12: #{tpu_custom_call.1} parent=1 // pred_region
      _
    $region13: #{tpu_custom_call.1} parent=1 // pred_fallthru
      _
    // Predicated region
    $region14: #{tpu_custom_call.1} parent=1 // pred_check
      _
    $region15: #{tpu_custom_call.1} parent=1 // pred_check_branch
      %39 = sbr.rel (0) target = $region17
    $region16: #{tpu_custom_call.1} parent=1 // pred_region
      %s41 = ssub.s32 2048, 2048
      %42 = vsyncadd [#allocation8], %s41
      %s43 = sshll.u32 [#allocation9], 4
      %s44 = int_to_ptr.vmem [resolvable:$true] %s43
      %49 = dma.hbm_to_vmem [thread:$0]  %s4, 2048, %s44, [#allocation8], 128, 128, 8
    $region17: #{tpu_custom_call.1} parent=1 // pred_fallthru
      _
    // Predicated region
    $region18: #{tpu_custom_call.1} parent=1 // pred_check
      _
    $region19: #{tpu_custom_call.1} parent=1 // pred_check_branch
      %51 = sbr.rel (0) target = $region21
    $region20: #{tpu_custom_call.1} parent=1 // pred_region
      %52 = dma.done [#allocation5], 128
    $region21: #{tpu_custom_call.1} parent=1 // pred_fallthru
      _
    // Predicated region
    $region22: #{tpu_custom_call.1} parent=1 // pred_check
      _
    $region23: #{tpu_custom_call.1} parent=1 // pred_check_branch
      %54 = sbr.rel (0) target = $region25
    $region24: #{tpu_custom_call.1} parent=1 // pred_region
      %55 = dma.done [#allocation8], 512
    $region25: #{tpu_custom_call.1} parent=1 // pred_fallthru
      _
    // Predicated region
    $region26: #{tpu_custom_call.1} parent=1 // pred_check
      _
    $region27: #{tpu_custom_call.1} parent=1 // pred_check_branch
      %57 = sbr.rel (0) target = $region29
    $region28: #{tpu_custom_call.1} parent=1 // pred_region
      %58 = dma.done [#allocation8], 2048
    $region29: #{tpu_custom_call.1} parent=1 // pred_fallthru
      _
    %v59 = vld [vmem:[#allocation4] sm:$0xff]
    %v60 = vld [vmem:[#allocation7] sm:$0xff]
    %v61 = vld [vmem:[#allocation7 + $0x8] sm:$0xff]
    %v62 = vld [vmem:[#allocation7 + $0x10] sm:$0xff]
    %v63 = vld [vmem:[#allocation7 + $0x18] sm:$0xff]
    %v64 = vld [vmem:[%s3] sm:$0x1]
    %v65 = vlaneseq
    %v66 = vshrl.u32 %v65, 7
    %v67 = vsub.s32 0, %v66
    %v68 = vrot.slane %v64, %v67
    %vm69 = vcmask 261120
    %v71 = vsel %vm69, %v59, 0
    %73 = vmatprep.subr.mxu0 0.0
    %74 = vmatpush1.msra.mxu0 %v60
    %75 = vmatprep.subr.mxu0 0.0
    %76 = vmatpush1.msra.mxu0 %v61
    %77 = vmatprep.subr.mxu0 0.0
    %78 = vmatpush1.msra.mxu0 %v62
    %79 = vmatprep.subr.mxu0 0.0
    %80 = vmatpush1.msra.mxu0 %v63
    %81 = vmatprep.subr.mxu0 0.0
    %82 = vmatpush1.msra.mxu0 0.0
    %83 = vmatprep.subr.mxu0 0.0
    %84 = vmatpush1.msra.mxu0 0.0
    %85 = vmatprep.subr.mxu0 0.0
    %86 = vmatpush1.msra.mxu0 0.0
    %87 = vmatprep.subr.mxu0 0.0
    %88 = vmatpush1.msra.mxu0 0.0
    %89 = vmatprep.subr.mxu0 0.0
    %90 = vmatpush1.msra.mxu0 0.0
    %91 = vmatprep.subr.mxu0 0.0
    %92 = vmatpush1.msra.mxu0 0.0
    %93 = vmatprep.subr.mxu0 0.0
    %94 = vmatpush1.msra.mxu0 0.0
    %95 = vmatprep.subr.mxu0 0.0
    %96 = vmatpush1.msra.mxu0 0.0
    %97 = vmatprep.subr.mxu0 0.0
    %98 = vmatpush1.msra.mxu0 0.0
    %99 = vmatprep.subr.mxu0 0.0
    %100 = vmatpush1.msra.mxu0 0.0
    %101 = vmatprep.subr.mxu0 0.0
    %102 = vmatpush1.msra.mxu0 0.0
    %103 = vmatprep.subr.mxu0 0.0
    %104 = vmatpush1.msra.mxu0 0.0
    %105 = vmatprep.subr.mxu0 0.0
    %106 = vmatpush1.msra.mxu0 0.0
    %107 = vmatprep.subr.mxu0 0.0
    %108 = vmatpush1.msra.mxu0 0.0
    %109 = vmatprep.subr.mxu0 0.0
    %110 = vmatpush1.msra.mxu0 0.0
    %111 = vmatprep.subr.mxu0 0.0
    %112 = vmatpush1.msra.mxu0 0.0
    %113 = vmatprep.subr.mxu0 0.0
    %114 = vmatpush1.msra.mxu0 0.0
    %115 = vmatprep.subr.mxu0 0.0
    %116 = vmatpush1.msra.mxu0 0.0
    %117 = vmatprep.subr.mxu0 0.0
    %118 = vmatpush1.msra.mxu0 0.0
    %119 = vmatprep.subr.mxu0 0.0
    %120 = vmatpush1.msra.mxu0 0.0
    %121 = vmatprep.subr.mxu0 0.0
    %122 = vmatpush1.msra.mxu0 0.0
    %123 = vmatprep.subr.mxu0 0.0
    %124 = vmatpush1.msra.mxu0 0.0
    %125 = vmatprep.subr.mxu0 0.0
    %126 = vmatpush1.msra.mxu0 0.0
    %127 = vmatprep.subr.mxu0 0.0
    %128 = vmatpush1.msra.mxu0 0.0
    %129 = vmatprep.subr.mxu0 0.0
    %130 = vmatpush1.msra.mxu0 0.0
    %131 = vmatprep.subr.mxu0 0.0
    %132 = vmatpush1.msra.mxu0 0.0
    %133 = vmatprep.subr.mxu0 0.0
    %134 = vmatpush1.msra.mxu0 0.0
    %135 = vmatprep.subr.mxu0 0.0
    %136 = vmatpush1.msra.mxu0 0.0
    %137 = vmatprep.mubr.f32.mxu0 0.0
    %138 = vmatmul.mubr.f32.gmra.mrb[0].mxu0 %v71
    %v139 = vpop.f32.mrb[0].mxu0
    %v140 = vadd.f32 %v68, %v139
    %v141 = vpop.f32.mrb[0].mxu0
    %142 = vdwg.mxu0
    %v143 = vlaneseq
    %v144 = vshrl.u32 %v143, 7
    %s145 = sld [smem:[#allocation3]]
    %v146 = vstv %s145
    %vm147 = vcmp.lt.s32.totalorder %v144, %v146
    %s148 = scvt.s32.f32 %s145
    %v149 = vstv %s148
    %v150 = vrcp.pop %v149
    %s151 = vtos %v150
    %v152 = vsel %vm147, %v140, 0.0
    %v153 = vrot.slane %v152, 4
    %v154 = vadd.f32 %v152, %v153
    %v155 = vrot.slane %v154, 2
    %v156 = vadd.f32 %v154, %v155
    %v157 = vrot.slane %v156, 1
    %v158 = vadd.f32 %v156, %v157
    %v159 = vstv %s151
    %v160 = vmul.f32 %v158, %v159
    %v161 = vsub.f32 %v140, %v160
    %v162 = vsel %vm147, %v161, 0.0
    %v163 = vmul.f32 %v162, %v162
    %v164 = vrot.slane %v163, 4
    %v165 = vadd.f32 %v163, %v164
    %v166 = vrot.slane %v165, 2
    %v167 = vadd.f32 %v165, %v166
    %v168 = vrot.slane %v167, 1
    %v169 = vadd.f32 %v167, %v168
    %v170 = vmul.f32 %v169, %v159
    %v171 = vld [vmem:[%s3 + $0x1] sm:$0x1]
    %v172 = vadd.f32 %v170, 1e-05
    %v173 = vrsqrt.pop %v172
    %v174 = vmul.f32 %v171, %v173
    %v175 = vld [vmem:[%s3 + $0x2] sm:$0x1]
    %v176 = vmul.f32 %v160, %v174
    %v177 = vsub.f32 %v175, %v176
    %v178 = vlaneseq
    %v179 = vshrl.u32 %v178, 7
    %v180 = vsub.s32 0, %v179
    %v181 = vrot.slane %v174, %v180
    %v182 = vmul.f32 %v140, %v181
    %v183 = vlaneseq
    %v184 = vshrl.u32 %v183, 7
    %v185 = vsub.s32 0, %v184
    %v186 = vrot.slane %v177, %v185
    %v187 = vadd.f32 %v182, %v186
    %v188 = vmax.f32 %v187, 0.0
    %v189 = vld [vmem:[#allocation9] sm:$0xff]
    %v190 = vld [vmem:[#allocation9 + $0x8] sm:$0xff]
    %v191 = vld [vmem:[#allocation9 + $0x10] sm:$0xff]
    %v192 = vld [vmem:[#allocation9 + $0x18] sm:$0xff]
    %v193 = vld [vmem:[#allocation9 + $0x20] sm:$0xff]
    %v194 = vld [vmem:[#allocation9 + $0x28] sm:$0xff]
    %v195 = vld [vmem:[#allocation9 + $0x30] sm:$0xff]
    %v196 = vld [vmem:[#allocation9 + $0x38] sm:$0xff]
    %v197 = vld [vmem:[#allocation9 + $0x40] sm:$0xff]
    %v198 = vld [vmem:[#allocation9 + $0x48] sm:$0xff]
    %v199 = vld [vmem:[#allocation9 + $0x50] sm:$0xff]
    %v200 = vld [vmem:[#allocation9 + $0x58] sm:$0xff]
    %v201 = vld [vmem:[#allocation9 + $0x60] sm:$0xff]
    %v202 = vld [vmem:[#allocation9 + $0x68] sm:$0xff]
    %v203 = vld [vmem:[#allocation9 + $0x70] sm:$0xff]
    %v204 = vld [vmem:[#allocation9 + $0x78] sm:$0xff]
    %v205 = vld [vmem:[%s3 + $0x3] sm:$0x1]
    %v206 = vlaneseq
    %v207 = vshrl.u32 %v206, 7
    %v208 = vsub.s32 0, %v207
    %v209 = vrot.slane %v205, %v208
    %210 = vmatprep.subr.mxu0 0.0
    %211 = vmatpush1.msra.mxu0 %v189
    %212 = vmatprep.subr.mxu0 0.0
    %213 = vmatpush1.msra.mxu0 %v190
    %214 = vmatprep.subr.mxu0 0.0
    %215 = vmatpush1.msra.mxu0 %v191
    %216 = vmatprep.subr.mxu0 0.0
    %217 = vmatpush1.msra.mxu0 %v192
    %218 = vmatprep.subr.mxu0 0.0
    %219 = vmatpush1.msra.mxu0 %v193
    %220 = vmatprep.subr.mxu0 0.0
    %221 = vmatpush1.msra.mxu0 %v194
    %222 = vmatprep.subr.mxu0 0.0
    %223 = vmatpush1.msra.mxu0 %v195
    %224 = vmatprep.subr.mxu0 0.0
    %225 = vmatpush1.msra.mxu0 %v196
    %226 = vmatprep.subr.mxu0 0.0
    %227 = vmatpush1.msra.mxu0 %v197
    %228 = vmatprep.subr.mxu0 0.0
    %229 = vmatpush1.msra.mxu0 %v198
    %230 = vmatprep.subr.mxu0 0.0
    %231 = vmatpush1.msra.mxu0 %v199
    %232 = vmatprep.subr.mxu0 0.0
    %233 = vmatpush1.msra.mxu0 %v200
    %234 = vmatprep.subr.mxu0 0.0
    %235 = vmatpush1.msra.mxu0 %v201
    %236 = vmatprep.subr.mxu0 0.0
    %237 = vmatpush1.msra.mxu0 %v202
    %238 = vmatprep.subr.mxu0 0.0
    %239 = vmatpush1.msra.mxu0 %v203
    %240 = vmatprep.subr.mxu0 0.0
    %241 = vmatpush1.msra.mxu0 %v204
    %242 = vmatprep.subr.mxu0 0.0
    %243 = vmatpush1.msra.mxu0 0.0
    %244 = vmatprep.subr.mxu0 0.0
    %245 = vmatpush1.msra.mxu0 0.0
    %246 = vmatprep.subr.mxu0 0.0
    %247 = vmatpush1.msra.mxu0 0.0
    %248 = vmatprep.subr.mxu0 0.0
    %249 = vmatpush1.msra.mxu0 0.0
    %250 = vmatprep.subr.mxu0 0.0
    %251 = vmatpush1.msra.mxu0 0.0
    %252 = vmatprep.subr.mxu0 0.0
    %253 = vmatpush1.msra.mxu0 0.0
    %254 = vmatprep.subr.mxu0 0.0
    %255 = vmatpush1.msra.mxu0 0.0
    %256 = vmatprep.subr.mxu0 0.0
    %257 = vmatpush1.msra.mxu0 0.0
    %258 = vmatprep.subr.mxu0 0.0
    %259 = vmatpush1.msra.mxu0 0.0
    %260 = vmatprep.subr.mxu0 0.0
    %261 = vmatpush1.msra.mxu0 0.0
    %262 = vmatprep.subr.mxu0 0.0
    %263 = vmatpush1.msra.mxu0 0.0
    %264 = vmatprep.subr.mxu0 0.0
    %265 = vmatpush1.msra.mxu0 0.0
    %266 = vmatprep.subr.mxu0 0.0
    %267 = vmatpush1.msra.mxu0 0.0
    %268 = vmatprep.subr.mxu0 0.0
    %269 = vmatpush1.msra.mxu0 0.0
    %270 = vmatprep.subr.mxu0 0.0
    %271 = vmatpush1.msra.mxu0 0.0
    %272 = vmatprep.subr.mxu0 0.0
    %273 = vmatpush1.msra.mxu0 0.0
    %274 = vmatprep.mubr.f32.mxu0 0.0
    %275 = vmatmul.mubr.f32.gmra.mrb[0].mxu0 %v188
    %v276 = vpop.f32.mrb[0].mxu0
    %v277 = vadd.f32 %v209, %v276
    %v278 = vpop.f32.mrb[0].mxu0
    %279 = vdwg.mxu0
    %280 = vst [vmem:[#allocation10] sm:$0xff] %v277
    // Predicated region
    $region30: #{tpu_custom_call.1} parent=1 // pred_check
      _
    $region31: #{tpu_custom_call.1} parent=1 // pred_check_branch
      %282 = sbr.rel (0) target = $region33
    $region32: #{tpu_custom_call.1} parent=1 // pred_region
      %s284 = ssub.s32 128, 128
      %285 = vsyncadd [#allocation6], %s284
      %s287 = sshll.u32 [#allocation10], 4
      %s288 = int_to_ptr.vmem [resolvable:$true] %s287
      %290 = dma.vmem_to_hbm [thread:$0]  %s288, 128, %s5, [#allocation6]
    $region33: #{tpu_custom_call.1} parent=1 // pred_fallthru
      _
    // Predicated region
    $region34: #{tpu_custom_call.1} parent=1 // pred_check
      _
    $region35: #{tpu_custom_call.1} parent=1 // pred_check_branch
      %292 = sbr.rel (0) target = $region37
    $region36: #{tpu_custom_call.1} parent=1 // pred_region
      %293 = dma.done [#allocation6], 128
    $region37: #{tpu_custom_call.1} parent=1 // pred_fallthru
      _
    %294 = vsyncpa [#allocation5], 1
    %295 = vsyncpa [#allocation8], 1
    %296 = vsyncpa [#allocation6], 1

</llo_original>
